<compile_context>
chip_gen: v5e
topology: v5e:2x2
jax: 0.10.0
libtpu: 0.0.40
codegen_flags: <defaults>
</compile_context>

<pallas_src>
import math
from functools import lru_cache

import jax
import jax.numpy as jnp
from jax.experimental import pallas as pl
from jax.experimental.pallas import tpu as pltpu

_LANE = 128
_SUBLANE = 8


# ----------------------------------------------------------------------------
# Positional-encoding table (identical to the PyTorch __init__)
# ----------------------------------------------------------------------------
def _make_pe_table(d_model: int, max_len: int = 5000) -> jnp.ndarray:
    position = jnp.arange(max_len, dtype=jnp.float32)[:, None]                  # (max_len, 1)
    div_term = jnp.exp(
        jnp.arange(0, d_model, 2, dtype=jnp.float32) * (-math.log(10000.0) / d_model)
    )                                                                           # (ceil(d/2),)
    pe = jnp.zeros((max_len, d_model), dtype=jnp.float32)
    pe = pe.at[:, 0::2].set(jnp.sin(position * div_term))
    # Slice div_term so odd d_model does not shape-mismatch (latent PyTorch bug).
    pe = pe.at[:, 1::2].set(jnp.cos(position * div_term[: d_model // 2]))
    return pe[:, None, :]                                                       # (max_len, 1, d_model)


@lru_cache(maxsize=8)
def _pe_table_cached(d_model: int, max_len: int) -> jnp.ndarray:
    return _make_pe_table(d_model, max_len)


@lru_cache(maxsize=64)
def _packed_pe_slab(d_model, max_len, S, B, rows, cols, dtype_name):
    """Batch-broadcast pe, packed to the same lane-dense 2-D layout as x.

    Pure constant of its (static) arguments -> built once, cached across calls.
    """
    dtype = jnp.dtype(dtype_name)
    pe2d = _pe_table_cached(d_model, max_len)[:S, 0, :].astype(dtype)           # (S, D)
    slab = jnp.broadcast_to(pe2d[:, None, :], (S, B, d_model)).reshape(rows, cols)
    return slab


# ----------------------------------------------------------------------------
# Hardware-generation-aware sizing
# ----------------------------------------------------------------------------
@lru_cache(maxsize=1)
def _tpu_generation() -> int:
    """Best-effort TPU generation (5 / 6 / 7 ...); falls back to 6."""
    try:
        info = pltpu.get_tpu_info()
        for attr in ("chip_version", "version", "generation"):
            v = getattr(info, attr, None)
            if v is not None:
                for ch in str(v):
                    if ch.isdigit():
                        return int(ch)
    except Exception:
        pass
    try:
        kind = str(jax.devices()[0].device_kind)  # e.g. "TPU v5 lite", "TPU v6e"
        for ch in kind:
            if ch.isdigit():
                return int(ch)
    except Exception:
        pass
    return 6


def _block_budget_bytes(gen: int) -> int:
    # Per-operand block budget. 3 operands x 2 buffers x budget stays inside
    # every generation's scoped-VMEM window (with the vmem_limit bump below).
    return (4 << 20) if gen >= 6 else (2 << 20)


def _min_pallas_bytes(gen: int) -> int:
    # Below this size the pallas_call fixed cost beats the HBM time; on v7x
    # (3.2 TB/s) the crossover moves up.
    return (1 << 20) if gen >= 7 else (256 << 10)


# ----------------------------------------------------------------------------
# Lane-dense packing of an (S, B, D) array into a 2-D (rows, cols) slab
# ----------------------------------------------------------------------------
def _packed_layout(S: int, B: int, D: int):
    """(rows, cols) with cols % 128 == 0 for a free contiguous reshape, or None."""
    n = S * B * D
    if D % _LANE == 0:
        return (S * B, D)
    for c in (2048, 1024, 640, 512, 384, 256, 128):
        if n % c == 0:
            return (n // c, c)
    return None


# ----------------------------------------------------------------------------
# Kernel: elementwise add on lane-dense (tr, cols) blocks
# ----------------------------------------------------------------------------
def _add_kernel(x_ref, pe_ref, o_ref):
    o_ref[...] = x_ref[...] + pe_ref[...]


def _lane_dense_add(x2: jnp.ndarray, pe2: jnp.ndarray, gen: int) -> jnp.ndarray:
    rows, cols = x2.shape
    itemsize = jnp.dtype(x2.dtype).itemsize
    row_bytes = cols * itemsize

    budget_rows = max(_SUBLANE, _block_budget_bytes(gen) // row_bytes)
    if rows <= budget_rows:
        tr = rows                                   # full dim -> always legal
    else:
        tr = (budget_rows // _SUBLANE) * _SUBLANE   # multiple of 8; ragged tail ok

    # v7x has two TensorCores: give the ("parallel",) grid >= 2 steps for
    # non-trivial inputs so both cores engage.
    if gen >= 7 and tr == rows and rows > 2 * _SUBLANE:
        tr = (((rows + 1) // 2) + _SUBLANE - 1) // _SUBLANE * _SUBLANE

    num_blocks = -(-rows // tr)
    block_bytes = tr * row_bytes
    # Headroom for 2x(x, pe, out) blocks; safe on every generation's physical VMEM.
    vmem_limit = min(48 << 20, max(32 << 20, 8 * block_bytes))

    return pl.pallas_call(
        _add_kernel,
        out_shape=jax.ShapeDtypeStruct((rows, cols), x2.dtype),
        grid_spec=pltpu.PrefetchScalarGridSpec(
            num_scalar_prefetch=0,
            grid=(num_blocks,),
            in_specs=[
                pl.BlockSpec((tr, cols), lambda i: (i, 0)),
                pl.BlockSpec((tr, cols), lambda i: (i, 0)),
            ],
            out_specs=pl.BlockSpec((tr, cols), lambda i: (i, 0)),
        ),
        compiler_params=pltpu.CompilerParams(
            dimension_semantics=("parallel",),      # shardable across v7x's 2 TCs
            vmem_limit_bytes=vmem_limit,
        ),
    )(x2, pe2)


# ----------------------------------------------------------------------------
# Module
# ----------------------------------------------------------------------------
class PositionalEncoding:
    """Pallas-backed equivalent of the PyTorch PositionalEncoding module."""

    def __init__(self, d_model: int, max_len: int = 5000):
        self.d_model = d_model
        self.max_len = max_len
        self.pe = _pe_table_cached(d_model, max_len)          # (max_len, 1, d_model)

    def __call__(self, x: jnp.ndarray, *, force_pallas: bool = False) -> jnp.ndarray:
        S, B, D = x.shape
        assert D == self.d_model and S <= self.max_len

        gen = _tpu_generation()
        layout = _packed_layout(S, B, D)
        nbytes = x.size * jnp.dtype(x.dtype).itemsize

        if layout is None or (not force_pallas and nbytes < _min_pallas_bytes(gen)):
            # Tiny or un-packable shapes: let XLA fuse the broadcast add.
            return x + self.pe[:S].astype(x.dtype)

        rows, cols = layout
        pe_slab = _packed_pe_slab(
            self.d_model, self.max_len, S, B, rows, cols, jnp.dtype(x.dtype).name
        )
        x2 = x.reshape(rows, cols)          # contiguous row-major reshape: free
        out2 = _lane_dense_add(x2, pe_slab, gen)
        return out2.reshape(S, B, D)

    forward = __call__


# ----------------------------------------------------------------------------
# Demo / self-check
# ----------------------------------------------------------------------------
if __name__ == "__main__":
    # Small shapes consistent with the module: seq=8, batch=2, d_model=32.
    S, B, D = 8, 2, 32
    key = jax.random.PRNGKey(0)
    x = jax.random.normal(key, (S, B, D), dtype=jnp.float32)

    module = PositionalEncoding(D, max_len=5000)
    ref = x + module.pe[:S]

    # force_pallas=True so the kernel itself is exercised even at this toy size
    # (the normal dispatch would hand such a small add to XLA).
    out = jax.block_until_ready(module(x, force_pallas=True))
    assert out.shape == (S, B, D)
    assert jnp.allclose(out, ref, atol=1e-6, rtol=1e-6)

    # Second call: exercises the cached pe-slab path (no rebuild).
    out_again = jax.block_until_ready(module(x, force_pallas=True))
    assert jnp.allclose(out_again, ref, atol=1e-6, rtol=1e-6)

    # Larger lane-aligned shape: exercises the multi-block tiled path.
    S2, B2, D2 = 2048, 4, 256
    key2 = jax.random.PRNGKey(1)
    x_big = jax.random.normal(key2, (S2, B2, D2), dtype=jnp.float32)
    module2 = PositionalEncoding(D2, max_len=5000)
    ref_big = x_big + module2.pe[:S2]
    out_big = jax.block_until_ready(module2(x_big))
    assert out_big.shape == (S2, B2, D2)
    assert jnp.allclose(out_big, ref_big, atol=1e-6, rtol=1e-6)

    print("KERNEL_OK")
</pallas_src>

<mosaic_0001>
module attributes {stable_mosaic.version = 11 : i64} {
  func.func @_add_kernel(%arg0: i32, %arg1: memref<1x512xf32, #tpu.memory_space<vmem>>, %arg2: memref<1x512xf32, #tpu.memory_space<vmem>>, %arg3: memref<1x512xf32, #tpu.memory_space<vmem>>) attributes {dimension_semantics = [#tpu.dimension_semantics<parallel>], iteration_bounds = array<i64: 1>, scalar_prefetch = 0 : i64, scratch_operands = 0 : i64, tpu.core_type = #tpu.core_type<tc>, window_params = [{transform_indices = @transform_0, window_bounds = array<i64: 1, 512>}, {transform_indices = @transform_1, window_bounds = array<i64: 1, 512>}, {transform_indices = @transform_2, window_bounds = array<i64: 1, 512>}]} {
    %c0 = arith.constant 0 : index
    %c0_0 = arith.constant 0 : index
    %0 = vector.load %arg1[%c0, %c0_0] : memref<1x512xf32, #tpu.memory_space<vmem>>, vector<1x512xf32>
    %c0_1 = arith.constant 0 : index
    %c0_2 = arith.constant 0 : index
    %1 = vector.load %arg2[%c0_1, %c0_2] : memref<1x512xf32, #tpu.memory_space<vmem>>, vector<1x512xf32>
    %2 = arith.addf %0, %1 : vector<1x512xf32>
    %c0_3 = arith.constant 0 : index
    %c0_4 = arith.constant 0 : index
    %3 = vector.load %arg3[%c0_3, %c0_4] : memref<1x512xf32, #tpu.memory_space<vmem>>, vector<1x512xf32>
    tpu.vector_store %arg3[%c0_3, %c0_4], %2 {strides = array<i32>} : memref<1x512xf32, #tpu.memory_space<vmem>>, vector<1x512xf32>,
    return
  }
  func.func @transform_0(%arg0: i32) -> (i32, i32) {
    %c0_i32 = arith.constant 0 : i32
    %c0_i32_0 = arith.constant 0 : i32
    return %arg0, %c0_i32 : i32, i32
  }
  func.func @transform_1(%arg0: i32) -> (i32, i32) {
    %c0_i32 = arith.constant 0 : i32
    %c0_i32_0 = arith.constant 0 : i32
    return %arg0, %c0_i32 : i32, i32
  }
  func.func @transform_2(%arg0: i32) -> (i32, i32) {
    %c0_i32 = arith.constant 0 : i32
    %c0_i32_0 = arith.constant 0 : i32
    return %arg0, %c0_i32 : i32, i32
  }
}

</mosaic_0001>

<llo_original>
// kernel: tpu_custom_call.1
$region0: #{tpu_custom_call.1}
  #allocation0 [shape = 'u32[]', space=smem, size = 0x4, offset = 0x4, fixed_abs, tag = 'smem constant byte address 0x4 - core index']
  #allocation1 [shape = 'u32[72,128]{1,0:T(1,128)}', space=vmem, size = 0x9000, scoped, tag = 'internal scratch']
  %s0 = inlined_call_operand.hbm [shape: f32[1,512], index: 0, kind: input, shape index: {}]
  %s1 = inlined_call_operand.hbm [shape: f32[1,512], index: 1, kind: input, shape index: {}]
  %s2 = inlined_call_operand.hbm [shape: f32[1,512], index: 2, kind: output, shape index: {}]
  %s3 = sld [smem:[#allocation0]]
  $region26: #{tpu_custom_call.1} parent=0
    _
  %s5 = ssub.s32 1, %s3
  %s6 = scalar_select 0, %s5, %s3
  $region1: #{tpu_custom_call.1} parent=0
    #allocation2 [shape = 'u8[2048]{0}', space=vmem, size = 0x800, scoped, tag = 'input window, operand 0, single buffered']
    #allocation3 [shape = 's32[1]{0}', space=sflag, size = 0x4, scoped, tag = 'scoped memory for tpu_custom_call.1']
    #allocation4 [shape = 's32[1]{0}', space=sflag, size = 0x4, scoped, tag = 'scoped memory for tpu_custom_call.1']
    #allocation5 [shape = 'u8[2048]{0}', space=vmem, size = 0x800, scoped, tag = 'input window, operand 1, single buffered']
    #allocation6 [shape = 's32[1]{0}', space=sflag, size = 0x4, scoped, tag = 'scoped memory for tpu_custom_call.1']
    #allocation7 [shape = 'u8[2048]{0}', space=vmem, size = 0x800, scoped, tag = 'output window, operand 0, single buffered']
    %7 = vsyncpa [#allocation3], 0
    %8 = vsyncpa [#allocation6], 0
    %9 = vsyncpa [#allocation4], 0
    // Predicated region
    $region2: #{tpu_custom_call.1} parent=1 // pred_check
      _
    $region3: #{tpu_custom_call.1} parent=1 // pred_check_branch
      %11 = sbr.rel (0) target = $region5
    $region4: #{tpu_custom_call.1} parent=1 // pred_region
      %13 = vsyncadd [#allocation3], 0
      %s15 = sshll.u32 %s0, 4
      %s16 = int_to_ptr.hbm [resolvable:$true] %s15
      %s17 = sshll.u32 [#allocation2], 4
      %s18 = int_to_ptr.vmem [resolvable:$true] %s17
      %20 = dma.hbm_to_vmem [thread:$0]  %s16, 64, %s18, [#allocation3]
    $region5: #{tpu_custom_call.1} parent=1 // pred_fallthru
      _
    // Predicated region
    $region6: #{tpu_custom_call.1} parent=1 // pred_check
      _
    $region7: #{tpu_custom_call.1} parent=1 // pred_check_branch
      %22 = sbr.rel (0) target = $region9
    $region8: #{tpu_custom_call.1} parent=1 // pred_region
      %24 = vsyncadd [#allocation6], 0
      %s26 = sshll.u32 %s1, 4
      %s27 = int_to_ptr.hbm [resolvable:$true] %s26
      %s28 = sshll.u32 [#allocation5], 4
      %s29 = int_to_ptr.vmem [resolvable:$true] %s28
      %31 = dma.hbm_to_vmem [thread:$0]  %s27, 64, %s29, [#allocation6]
    $region9: #{tpu_custom_call.1} parent=1 // pred_fallthru
      _
    // Predicated region
    $region10: #{tpu_custom_call.1} parent=1 // pred_check
      _
    $region11: #{tpu_custom_call.1} parent=1 // pred_check_branch
      %33 = sbr.rel (0) target = $region13
    $region12: #{tpu_custom_call.1} parent=1 // pred_region
      %35 = dma.done [#allocation3], 64
    $region13: #{tpu_custom_call.1} parent=1 // pred_fallthru
      _
    // Predicated region
    $region14: #{tpu_custom_call.1} parent=1 // pred_check
      _
    $region15: #{tpu_custom_call.1} parent=1 // pred_check_branch
      %37 = sbr.rel (0) target = $region17
    $region16: #{tpu_custom_call.1} parent=1 // pred_region
      %39 = dma.done [#allocation6], 64
    $region17: #{tpu_custom_call.1} parent=1 // pred_fallthru
      _
    %v40 = vld [vmem:[#allocation2] sm:$0xf]
    %v41 = vld [vmem:[#allocation5] sm:$0xf]
    %v42 = vadd.f32 %v40, %v41
    %v43 = vlaneseq
    %vm44 = vcmp.ge.s32.totalorder %v43, 0
    %vm45 = vcmp.lt.s32.totalorder %v43, 512
    %vm46 = vmand %vm44, %vm45
    %47 = vst.msk [vmem:[#allocation7] sm:$0xf] %vm46, %v42
    // Predicated region
    $region18: #{tpu_custom_call.1} parent=1 // pred_check
      _
    $region19: #{tpu_custom_call.1} parent=1 // pred_check_branch
      %49 = sbr.rel (0) target = $region21
    $region20: #{tpu_custom_call.1} parent=1 // pred_region
      %51 = vsyncadd [#allocation4], 0
      %s53 = sshll.u32 [#allocation7], 4
      %s54 = int_to_ptr.vmem [resolvable:$true] %s53
      %s55 = sshll.u32 %s2, 4
      %s56 = int_to_ptr.hbm [resolvable:$true] %s55
      %58 = dma.vmem_to_hbm [thread:$0]  %s54, 64, %s56, [#allocation4]
    $region21: #{tpu_custom_call.1} parent=1 // pred_fallthru
      _
    // Predicated region
    $region22: #{tpu_custom_call.1} parent=1 // pred_check
      _
    $region23: #{tpu_custom_call.1} parent=1 // pred_check_branch
      %60 = sbr.rel (0) target = $region25
    $region24: #{tpu_custom_call.1} parent=1 // pred_region
      %62 = dma.done [#allocation4], 64
    $region25: #{tpu_custom_call.1} parent=1 // pred_fallthru
      _
    %63 = vsyncpa [#allocation3], 1
    %64 = vsyncpa [#allocation6], 1
    %65 = vsyncpa [#allocation4], 1

</llo_original>
